<compile_context>
chip_gen: v7x
topology: tpu7x:2x2x1
jax: 0.10.0
libtpu: 0.0.40
codegen_flags: <defaults>
</compile_context>

<pallas_src>
import functools

import jax
import jax.numpy as jnp
from jax.experimental import pallas as pl
from jax.experimental.pallas import tpu as pltpu


def _round_up(a, b):
    return ((a + b - 1) // b) * b


def _indrnn_kernel(x_ref, w_ref, h0_ref, out_ref, h_scratch, *, tt, unroll):
    # x_ref:     (tt, SB, 128) input block: tt timesteps of a dense (SB,128) tile
    # w_ref:     (SB, 128)     recurrent weight tile (weight_hh tiled over batch)
    # h0_ref:    (SB, 128)     initial hidden state tile
    # out_ref:   (tt, SB, 128) output block
    # h_scratch: (SB, 128)     float32 hidden-state carry across time blocks
    #
    # NOTE: the recurrence relies on the time axis being the TRAILING
    # ("arbitrary", sequential) grid dimension and on scratch persisting across
    # grid steps.  Do not reorder the grid axes.
    tb = pl.program_id(1)  # time-block index (sequential)

    @pl.when(tb == 0)
    def _():
        h_scratch[...] = h0_ref[...].astype(jnp.float32)

    # Hoisted once per block (not per timestep).
    w = w_ref[...].astype(jnp.float32)        # (SB, 128)
    h_init = h_scratch[...]                   # (SB, 128) f32 carry

    n_chunks = tt // unroll

    def chunk_body(c, h):
        base = pl.multiple_of(c * unroll, unroll)
        for k in range(unroll):               # static partial unroll -> bounded live ranges
            t = base + k
            xt = x_ref[t].astype(jnp.float32)            # dense (SB, 128) tile
            h = jnp.maximum(xt + w * h, 0.0)
            out_ref[t] = h.astype(out_ref.dtype)         # per-step dense store
        return h

    h = jax.lax.fori_loop(0, n_chunks, chunk_body, h_init)
    # Write the carry back once per block.
    h_scratch[...] = h


def _pick_sublane_tile(r, sub_mult, max_sb):
    """Sublane-tile extent SB: a multiple of sub_mult dividing r, <= max_sb,
    keeping >= 2 tiles whenever possible so the 'parallel' grid axis can be
    sharded across TensorCores on multi-TC chips (v7x)."""
    cap = min(max_sb, r)
    if r >= 2 * sub_mult:
        cap = min(cap, r // 2)
    best = sub_mult
    s = sub_mult
    while s <= cap:
        if r % s == 0:
            best = s
        s += sub_mult
    return best


def indrnn_onlyrecurrent(x, weight_hh, h0=None, *, tt=64, unroll=8, max_sublane_tile=64):
    """IndRNN (recurrent-only) forward: h_t = relu(x_t + weight_hh * h_{t-1}).

    x: (T, B, H) seq-major; weight_hh: (H,); h0: (B, H) or None (zeros).
    Returns the full sequence of hidden states, shape (T, B, H).
    """
    assert x.ndim == 3, "this wrapper uses the 3-D (seq, batch, hidden) layout"
    T, B, H = x.shape
    if h0 is None:
        h0 = jnp.zeros((B, H), dtype=x.dtype)
    else:
        assert h0.shape == (B, H)
    assert weight_hh.shape == (H,)

    itemsize = jnp.dtype(x.dtype).itemsize
    sub_mult = max(8, 32 // itemsize)   # 8 for f32, 16 for bf16, 32 for 8-bit types

    # ---- time blocking -----------------------------------------------------
    unroll = max(1, unroll)
    tt = max(unroll, min(tt, _round_up(T, unroll)))  # don't over-pad short sequences
    tt = _round_up(tt, unroll)                       # unroll | tt
    T_pad = _round_up(T, tt)

    # ---- flatten (B, H) into a dense (sublane, lane) = (R, 128) layout ------
    N = B * H
    R0 = (N + 127) // 128
    if R0 <= sub_mult:
        R = R0
        SB = R0                       # full-extent sublane block (always legal)
    else:
        R = _round_up(R0, sub_mult)
        SB = _pick_sublane_tile(R, sub_mult, max_sublane_tile)
    N_pad = R * 128

    x2 = x.reshape(T, N)
    w_flat = jnp.tile(weight_hh.astype(x.dtype), (B,))   # (N,), index n = b*H + h
    h0_flat = h0.astype(x.dtype).reshape(N)
    if N_pad != N:
        x2 = jnp.pad(x2, ((0, 0), (0, N_pad - N)))
        w_flat = jnp.pad(w_flat, (0, N_pad - N))
        h0_flat = jnp.pad(h0_flat, (0, N_pad - N))
    if T_pad != T:
        x2 = jnp.pad(x2, ((0, T_pad - T), (0, 0)))

    x3 = x2.reshape(T_pad, R, 128)
    w3 = w_flat.reshape(R, 128)
    h03 = h0_flat.reshape(R, 128)

    grid = (R // SB, T_pad // tt)  # (parallel sublane tiles, sequential time blocks)

    # ---- VMEM budget (explicit, with headroom; respects v7x's 64 MiB VMEM) --
    blk_bytes = tt * SB * 128 * itemsize
    small_bytes = SB * 128 * itemsize
    need = 2 * blk_bytes          # x, double-buffered
    need += 2 * blk_bytes         # out, double-buffered
    need += 4 * small_bytes       # w + h0, double-buffered
    need += SB * 128 * 4          # f32 carry scratch
    vmem_limit = int(min(max(2 * need + (2 << 20), 16 << 20), 48 << 20))

    cost = pl.CostEstimate(
        flops=3 * T_pad * N_pad,
        transcendentals=0,
        bytes_accessed=2 * T_pad * N_pad * itemsize + 2 * N_pad * itemsize,
    )

    kernel = functools.partial(_indrnn_kernel, tt=tt, unroll=unroll)
    out = pl.pallas_call(
        kernel,
        out_shape=jax.ShapeDtypeStruct((T_pad, R, 128), x.dtype),
        grid_spec=pltpu.PrefetchScalarGridSpec(
            num_scalar_prefetch=0,
            grid=grid,
            in_specs=[
                pl.BlockSpec((tt, SB, 128), lambda n, t: (t, n, 0)),   # x block
                pl.BlockSpec((SB, 128), lambda n, t: (n, 0)),          # weight tile
                pl.BlockSpec((SB, 128), lambda n, t: (n, 0)),          # h0 tile
            ],
            out_specs=pl.BlockSpec((tt, SB, 128), lambda n, t: (t, n, 0)),
            scratch_shapes=[pltpu.VMEM((SB, 128), jnp.float32)],       # f32 carry
        ),
        compiler_params=pltpu.CompilerParams(
            dimension_semantics=("parallel", "arbitrary"),
            vmem_limit_bytes=vmem_limit,
        ),
        cost_estimate=cost,
    )(x3, w3, h03)

    return out.reshape(T_pad, N_pad)[:T, :N].reshape(T, B, H)


def _reference(x, w, h0):
    # pure-JAX reference for correctness check
    def step(h, xt):
        h_new = jnp.maximum(xt + w[None, :] * h, 0.0)
        return h_new, h_new
    _, ys = jax.lax.scan(step, h0, x)
    return ys


if __name__ == "__main__":
    key = jax.random.PRNGKey(0)
    k_x, k_w, k_x2, k_w2, k_h2 = jax.random.split(key, 5)

    # --- small config consistent with the module: seq=8, batch=4, hidden=32 ---
    T, B, H = 8, 4, 32
    x = jax.random.normal(k_x, (T, B, H), dtype=jnp.float32)
    # reset_parameters: uniform(a=0, b=1) init of weight_hh
    weight_hh = jax.random.uniform(k_w, (H,), dtype=jnp.float32, minval=0.0, maxval=1.0)
    h0 = jnp.zeros((B, H), dtype=jnp.float32)  # forward default: zero hidden init

    out = indrnn_onlyrecurrent(x, weight_hh, h0)
    out = jax.block_until_ready(out)
    ref = _reference(x, weight_hh, h0)
    assert out.shape == x.shape
    assert jnp.allclose(out, ref, atol=1e-5, rtol=1e-5), "mismatch vs reference (small)"

    # --- second config exercising dense sublane tiles, >1 parallel tile and
    # --- the fori_loop time path (still small) ---
    T2, B2, H2 = 40, 8, 256
    x2 = jax.random.normal(k_x2, (T2, B2, H2), dtype=jnp.float32)
    w2 = jax.random.uniform(k_w2, (H2,), dtype=jnp.float32, minval=0.0, maxval=1.0)
    h02 = jax.random.normal(k_h2, (B2, H2), dtype=jnp.float32)

    out2 = indrnn_onlyrecurrent(x2, w2, h02)
    out2 = jax.block_until_ready(out2)
    ref2 = _reference(x2, w2, h02)
    assert out2.shape == x2.shape
    assert jnp.allclose(out2, ref2, atol=1e-5, rtol=1e-5), "mismatch vs reference (dense)"

    print("KERNEL_OK")
</pallas_src>

<mosaic_0001>
module attributes {stable_mosaic.version = 11 : i64} {
  func.func @_indrnn_kernel(%arg0: i32, %arg1: i32, %arg2: memref<8x1x128xf32, #tpu.memory_space<vmem>>, %arg3: memref<1x128xf32, #tpu.memory_space<vmem>>, %arg4: memref<1x128xf32, #tpu.memory_space<vmem>>, %arg5: memref<8x1x128xf32, #tpu.memory_space<vmem>>, %arg6: memref<1x128xf32, #tpu.memory_space<vmem>>) attributes {dimension_semantics = [#tpu.dimension_semantics<parallel>, #tpu.dimension_semantics<arbitrary>], iteration_bounds = array<i64: 1, 1>, scalar_prefetch = 0 : i64, scratch_operands = 1 : i64, tpu.core_type = #tpu.core_type<tc>, window_params = [{transform_indices = @transform_0, window_bounds = array<i64: 8, 1, 128>}, {transform_indices = @transform_1, window_bounds = array<i64: 1, 128>}, {transform_indices = @transform_2, window_bounds = array<i64: 1, 128>}, {transform_indices = @transform_3, window_bounds = array<i64: 8, 1, 128>}]} {
    %c0_i32 = arith.constant 0 : i32
    %0 = arith.cmpi eq, %arg1, %c0_i32 : i32
    %1 = arith.extui %0 : i1 to i32
    %c0_i32_0 = arith.constant 0 : i32
    %2 = arith.cmpi ne, %1, %c0_i32_0 : i32
    scf.if %2 {
      %c0_48 = arith.constant 0 : index
      %c0_49 = arith.constant 0 : index
      %104 = vector.load %arg4[%c0_48, %c0_49] : memref<1x128xf32, #tpu.memory_space<vmem>>, vector<1x128xf32>
      %c0_50 = arith.constant 0 : index
      %c0_51 = arith.constant 0 : index
      %105 = vector.load %arg6[%c0_50, %c0_51] : memref<1x128xf32, #tpu.memory_space<vmem>>, vector<1x128xf32>
      tpu.vector_store %arg6[%c0_50, %c0_51], %104 {strides = array<i32>} : memref<1x128xf32, #tpu.memory_space<vmem>>, vector<1x128xf32>,
    } else {
    }
    %c0 = arith.constant 0 : index
    %c0_1 = arith.constant 0 : index
    %3 = vector.load %arg3[%c0, %c0_1] : memref<1x128xf32, #tpu.memory_space<vmem>>, vector<1x128xf32>
    %c0_2 = arith.constant 0 : index
    %c0_3 = arith.constant 0 : index
    %4 = vector.load %arg6[%c0_2, %c0_3] : memref<1x128xf32, #tpu.memory_space<vmem>>, vector<1x128xf32>
    %c0_i32_4 = arith.constant 0 : i32
    %c8_i32 = arith.constant 8 : i32
    %5 = arith.muli %c0_i32_4, %c8_i32 : i32
    %6 = tpu.assume_multiple %5, 8 : i32
    %c0_i32_5 = arith.constant 0 : i32
    %7 = arith.addi %6, %c0_i32_5 : i32
    %8 = arith.index_cast %7 : i32 to index
    %c0_6 = arith.constant 0 : index
    %c0_7 = arith.constant 0 : index
    %9 = vector.load %arg2[%8, %c0_6, %c0_7] : memref<8x1x128xf32, #tpu.memory_space<vmem>>, vector<1x1x128xf32>
    %10 = vector.shape_cast %9 : vector<1x1x128xf32> to vector<1x128xf32>
    %11 = arith.mulf %3, %4 : vector<1x128xf32>
    %12 = arith.addf %10, %11 : vector<1x128xf32>
    %cst = arith.constant 0.000000e+00 : f32
    %13 = vector.broadcast %cst : f32 to vector<1x128xf32>
    %14 = arith.maximumf %12, %13 : vector<1x128xf32>
    %15 = arith.index_cast %7 : i32 to index
    %c0_8 = arith.constant 0 : index
    %c0_9 = arith.constant 0 : index
    %16 = vector.load %arg5[%15, %c0_8, %c0_9] : memref<8x1x128xf32, #tpu.memory_space<vmem>>, vector<1x1x128xf32>
    %17 = vector.shape_cast %16 : vector<1x1x128xf32> to vector<1x128xf32>
    %18 = vector.shape_cast %14 : vector<1x128xf32> to vector<1x1x128xf32>
    tpu.vector_store %arg5[%15, %c0_8, %c0_9], %18 {strides = array<i32>} : memref<8x1x128xf32, #tpu.memory_space<vmem>>, vector<1x1x128xf32>,
    %c1_i32 = arith.constant 1 : i32
    %19 = arith.addi %6, %c1_i32 : i32
    %20 = arith.index_cast %19 : i32 to index
    %c0_10 = arith.constant 0 : index
    %c0_11 = arith.constant 0 : index
    %21 = vector.load %arg2[%20, %c0_10, %c0_11] : memref<8x1x128xf32, #tpu.memory_space<vmem>>, vector<1x1x128xf32>
    %22 = vector.shape_cast %21 : vector<1x1x128xf32> to vector<1x128xf32>
    %23 = arith.mulf %3, %14 : vector<1x128xf32>
    %24 = arith.addf %22, %23 : vector<1x128xf32>
    %cst_12 = arith.constant 0.000000e+00 : f32
    %25 = vector.broadcast %cst_12 : f32 to vector<1x128xf32>
    %26 = arith.maximumf %24, %25 : vector<1x128xf32>
    %27 = arith.index_cast %19 : i32 to index
    %c0_13 = arith.constant 0 : index
    %c0_14 = arith.constant 0 : index
    %28 = vector.load %arg5[%27, %c0_13, %c0_14] : memref<8x1x128xf32, #tpu.memory_space<vmem>>, vector<1x1x128xf32>
    %29 = vector.shape_cast %28 : vector<1x1x128xf32> to vector<1x128xf32>
    %30 = vector.shape_cast %26 : vector<1x128xf32> to vector<1x1x128xf32>
    tpu.vector_store %arg5[%27, %c0_13, %c0_14], %30 {strides = array<i32>} : memref<8x1x128xf32, #tpu.memory_space<vmem>>, vector<1x1x128xf32>,
    %c2_i32 = arith.constant 2 : i32
    %31 = arith.addi %6, %c2_i32 : i32
    %32 = arith.index_cast %31 : i32 to index
    %c0_15 = arith.constant 0 : index
    %c0_16 = arith.constant 0 : index
    %33 = vector.load %arg2[%32, %c0_15, %c0_16] : memref<8x1x128xf32, #tpu.memory_space<vmem>>, vector<1x1x128xf32>
    %34 = vector.shape_cast %33 : vector<1x1x128xf32> to vector<1x128xf32>
    %35 = arith.mulf %3, %26 : vector<1x128xf32>
    %36 = arith.addf %34, %35 : vector<1x128xf32>
    %cst_17 = arith.constant 0.000000e+00 : f32
    %37 = vector.broadcast %cst_17 : f32 to vector<1x128xf32>
    %38 = arith.maximumf %36, %37 : vector<1x128xf32>
    %39 = arith.index_cast %31 : i32 to index
    %c0_18 = arith.constant 0 : index
    %c0_19 = arith.constant 0 : index
    %40 = vector.load %arg5[%39, %c0_18, %c0_19] : memref<8x1x128xf32, #tpu.memory_space<vmem>>, vector<1x1x128xf32>
    %41 = vector.shape_cast %40 : vector<1x1x128xf32> to vector<1x128xf32>
    %42 = vector.shape_cast %38 : vector<1x128xf32> to vector<1x1x128xf32>
    tpu.vector_store %arg5[%39, %c0_18, %c0_19], %42 {strides = array<i32>} : memref<8x1x128xf32, #tpu.memory_space<vmem>>, vector<1x1x128xf32>,
    %c3_i32 = arith.constant 3 : i32
    %43 = arith.addi %6, %c3_i32 : i32
    %44 = arith.index_cast %43 : i32 to index
    %c0_20 = arith.constant 0 : index
    %c0_21 = arith.constant 0 : index
    %45 = vector.load %arg2[%44, %c0_20, %c0_21] : memref<8x1x128xf32, #tpu.memory_space<vmem>>, vector<1x1x128xf32>
    %46 = vector.shape_cast %45 : vector<1x1x128xf32> to vector<1x128xf32>
    %47 = arith.mulf %3, %38 : vector<1x128xf32>
    %48 = arith.addf %46, %47 : vector<1x128xf32>
    %cst_22 = arith.constant 0.000000e+00 : f32
    %49 = vector.broadcast %cst_22 : f32 to vector<1x128xf32>
    %50 = arith.maximumf %48, %49 : vector<1x128xf32>
    %51 = arith.index_cast %43 : i32 to index
    %c0_23 = arith.constant 0 : index
    %c0_24 = arith.constant 0 : index
    %52 = vector.load %arg5[%51, %c0_23, %c0_24] : memref<8x1x128xf32, #tpu.memory_space<vmem>>, vector<1x1x128xf32>
    %53 = vector.shape_cast %52 : vector<1x1x128xf32> to vector<1x128xf32>
    %54 = vector.shape_cast %50 : vector<1x128xf32> to vector<1x1x128xf32>
    tpu.vector_store %arg5[%51, %c0_23, %c0_24], %54 {strides = array<i32>} : memref<8x1x128xf32, #tpu.memory_space<vmem>>, vector<1x1x128xf32>,
    %c4_i32 = arith.constant 4 : i32
    %55 = arith.addi %6, %c4_i32 : i32
    %56 = arith.index_cast %55 : i32 to index
    %c0_25 = arith.constant 0 : index
    %c0_26 = arith.constant 0 : index
    %57 = vector.load %arg2[%56, %c0_25, %c0_26] : memref<8x1x128xf32, #tpu.memory_space<vmem>>, vector<1x1x128xf32>
    %58 = vector.shape_cast %57 : vector<1x1x128xf32> to vector<1x128xf32>
    %59 = arith.mulf %3, %50 : vector<1x128xf32>
    %60 = arith.addf %58, %59 : vector<1x128xf32>
    %cst_27 = arith.constant 0.000000e+00 : f32
    %61 = vector.broadcast %cst_27 : f32 to vector<1x128xf32>
    %62 = arith.maximumf %60, %61 : vector<1x128xf32>
    %63 = arith.index_cast %55 : i32 to index
    %c0_28 = arith.constant 0 : index
    %c0_29 = arith.constant 0 : index
    %64 = vector.load %arg5[%63, %c0_28, %c0_29] : memref<8x1x128xf32, #tpu.memory_space<vmem>>, vector<1x1x128xf32>
    %65 = vector.shape_cast %64 : vector<1x1x128xf32> to vector<1x128xf32>
    %66 = vector.shape_cast %62 : vector<1x128xf32> to vector<1x1x128xf32>
    tpu.vector_store %arg5[%63, %c0_28, %c0_29], %66 {strides = array<i32>} : memref<8x1x128xf32, #tpu.memory_space<vmem>>, vector<1x1x128xf32>,
    %c5_i32 = arith.constant 5 : i32
    %67 = arith.addi %6, %c5_i32 : i32
    %68 = arith.index_cast %67 : i32 to index
    %c0_30 = arith.constant 0 : index
    %c0_31 = arith.constant 0 : index
    %69 = vector.load %arg2[%68, %c0_30, %c0_31] : memref<8x1x128xf32, #tpu.memory_space<vmem>>, vector<1x1x128xf32>
    %70 = vector.shape_cast %69 : vector<1x1x128xf32> to vector<1x128xf32>
    %71 = arith.mulf %3, %62 : vector<1x128xf32>
    %72 = arith.addf %70, %71 : vector<1x128xf32>
    %cst_32 = arith.constant 0.000000e+00 : f32
    %73 = vector.broadcast %cst_32 : f32 to vector<1x128xf32>
    %74 = arith.maximumf %72, %73 : vector<1x128xf32>
    %75 = arith.index_cast %67 : i32 to index
    %c0_33 = arith.constant 0 : index
    %c0_34 = arith.constant 0 : index
    %76 = vector.load %arg5[%75, %c0_33, %c0_34] : memref<8x1x128xf32, #tpu.memory_space<vmem>>, vector<1x1x128xf32>
    %77 = vector.shape_cast %76 : vector<1x1x128xf32> to vector<1x128xf32>
    %78 = vector.shape_cast %74 : vector<1x128xf32> to vector<1x1x128xf32>
    tpu.vector_store %arg5[%75, %c0_33, %c0_34], %78 {strides = array<i32>} : memref<8x1x128xf32, #tpu.memory_space<vmem>>, vector<1x1x128xf32>,
    %c6_i32 = arith.constant 6 : i32
    %79 = arith.addi %6, %c6_i32 : i32
    %80 = arith.index_cast %79 : i32 to index
    %c0_35 = arith.constant 0 : index
    %c0_36 = arith.constant 0 : index
    %81 = vector.load %arg2[%80, %c0_35, %c0_36] : memref<8x1x128xf32, #tpu.memory_space<vmem>>, vector<1x1x128xf32>
    %82 = vector.shape_cast %81 : vector<1x1x128xf32> to vector<1x128xf32>
    %83 = arith.mulf %3, %74 : vector<1x128xf32>
    %84 = arith.addf %82, %83 : vector<1x128xf32>
    %cst_37 = arith.constant 0.000000e+00 : f32
    %85 = vector.broadcast %cst_37 : f32 to vector<1x128xf32>
    %86 = arith.maximumf %84, %85 : vector<1x128xf32>
    %87 = arith.index_cast %79 : i32 to index
    %c0_38 = arith.constant 0 : index
    %c0_39 = arith.constant 0 : index
    %88 = vector.load %arg5[%87, %c0_38, %c0_39] : memref<8x1x128xf32, #tpu.memory_space<vmem>>, vector<1x1x128xf32>
    %89 = vector.shape_cast %88 : vector<1x1x128xf32> to vector<1x128xf32>
    %90 = vector.shape_cast %86 : vector<1x128xf32> to vector<1x1x128xf32>
    tpu.vector_store %arg5[%87, %c0_38, %c0_39], %90 {strides = array<i32>} : memref<8x1x128xf32, #tpu.memory_space<vmem>>, vector<1x1x128xf32>,
    %c7_i32 = arith.constant 7 : i32
    %91 = arith.addi %6, %c7_i32 : i32
    %92 = arith.index_cast %91 : i32 to index
    %c0_40 = arith.constant 0 : index
    %c0_41 = arith.constant 0 : index
    %93 = vector.load %arg2[%92, %c0_40, %c0_41] : memref<8x1x128xf32, #tpu.memory_space<vmem>>, vector<1x1x128xf32>
    %94 = vector.shape_cast %93 : vector<1x1x128xf32> to vector<1x128xf32>
    %95 = arith.mulf %3, %86 : vector<1x128xf32>
    %96 = arith.addf %94, %95 : vector<1x128xf32>
    %cst_42 = arith.constant 0.000000e+00 : f32
    %97 = vector.broadcast %cst_42 : f32 to vector<1x128xf32>
    %98 = arith.maximumf %96, %97 : vector<1x128xf32>
    %99 = arith.index_cast %91 : i32 to index
    %c0_43 = arith.constant 0 : index
    %c0_44 = arith.constant 0 : index
    %100 = vector.load %arg5[%99, %c0_43, %c0_44] : memref<8x1x128xf32, #tpu.memory_space<vmem>>, vector<1x1x128xf32>
    %101 = vector.shape_cast %100 : vector<1x1x128xf32> to vector<1x128xf32>
    %102 = vector.shape_cast %98 : vector<1x128xf32> to vector<1x1x128xf32>
    tpu.vector_store %arg5[%99, %c0_43, %c0_44], %102 {strides = array<i32>} : memref<8x1x128xf32, #tpu.memory_space<vmem>>, vector<1x1x128xf32>,
    %c1_i32_45 = arith.constant 1 : i32
    %c0_46 = arith.constant 0 : index
    %c0_47 = arith.constant 0 : index
    %103 = vector.load %arg6[%c0_46, %c0_47] : memref<1x128xf32, #tpu.memory_space<vmem>>, vector<1x128xf32>
    tpu.vector_store %arg6[%c0_46, %c0_47], %98 {strides = array<i32>} : memref<1x128xf32, #tpu.memory_space<vmem>>, vector<1x128xf32>,
    return
  }
  func.func @transform_0(%arg0: i32, %arg1: i32) -> (i32, i32, i32) {
    %c0_i32 = arith.constant 0 : i32
    %c0_i32_0 = arith.constant 0 : i32
    return %arg1, %arg0, %c0_i32 : i32, i32, i32
  }
  func.func @transform_1(%arg0: i32, %arg1: i32) -> (i32, i32) {
    %c0_i32 = arith.constant 0 : i32
    %c0_i32_0 = arith.constant 0 : i32
    return %arg0, %c0_i32 : i32, i32
  }
  func.func @transform_2(%arg0: i32, %arg1: i32) -> (i32, i32) {
    %c0_i32 = arith.constant 0 : i32
    %c0_i32_0 = arith.constant 0 : i32
    return %arg0, %c0_i32 : i32, i32
  }
  func.func @transform_3(%arg0: i32, %arg1: i32) -> (i32, i32, i32) {
    %c0_i32 = arith.constant 0 : i32
    %c0_i32_0 = arith.constant 0 : i32
    return %arg1, %arg0, %c0_i32 : i32, i32, i32
  }
}

</mosaic_0001>

<llo_original>
// kernel: tpu_custom_call.1
$region0: #{tpu_custom_call.1}
  #allocation0 [shape = 'u32[]', space=smem, size = 0x4, offset = 0x4, fixed_abs, tag = 'smem constant byte address 0x4 - core index']
  #allocation1 [shape = 'u32[144,128]{1,0:T(1,128)}', space=vmem, size = 0x12000, scoped, tag = 'internal scratch']
  #allocation2 [shape = 'f32[1,128]{1,0:T(1,128)}', space=vmem, size = 0x200, scoped, tag = 'scratch operand']
  %s0 = inlined_call_operand.hbm [shape: f32[8,1,128], index: 0, kind: input, shape index: {}]
  %s1 = inlined_call_operand.vmem [shape: f32[1,128], index: 1, kind: input, shape index: {}]
  %s2 = inlined_call_operand.vmem [shape: f32[1,128], index: 2, kind: input, shape index: {}]
  %s3 = inlined_call_operand.hbm [shape: f32[8,1,128], index: 3, kind: output, shape index: {}]
  %s4 = sld [smem:[#allocation0]]
  $region30: #{tpu_custom_call.1} parent=0
    _
  %s6 = ssub.s32 1, %s4
  %s7 = scalar_select 0, %s6, %s4
  $region1: #{tpu_custom_call.1} parent=0
    #allocation3 [shape = 'u8[4096]{0}', space=vmem, size = 0x1000, scoped, tag = 'input window, operand 0, single buffered']
    #allocation4 [shape = 's32[1]{0}', space=sflag, size = 0x4, scoped, tag = 'scoped memory for tpu_custom_call.1']
    #allocation5 [shape = 's32[1]{0}', space=sflag, size = 0x4, scoped, tag = 'scoped memory for tpu_custom_call.1']
    #allocation6 [shape = 'u8[4096]{0}', space=vmem, size = 0x1000, scoped, tag = 'output window, operand 0, single buffered']
    %8 = vsyncpa [#allocation4], 0
    %9 = vsyncpa [#allocation5], 0
    // Predicated region
    $region2: #{tpu_custom_call.1} parent=1 // pred_check
      _
    $region3: #{tpu_custom_call.1} parent=1 // pred_check_branch
      %11 = sbr.rel (0) target = $region5
    $region4: #{tpu_custom_call.1} parent=1 // pred_region
      %s13 = ssub.s32 128, 128
      %14 = vsyncadd [#allocation4], %s13
      %s15 = sshll.u32 [#allocation3], 4
      %s16 = int_to_ptr.vmem [resolvable:$true] %s15
      %21 = dma.hbm_to_vmem [thread:$0]  %s0, 128, %s16, [#allocation4], 16, 16, 1
    $region5: #{tpu_custom_call.1} parent=1 // pred_fallthru
      _
    // Predicated region
    $region6: #{tpu_custom_call.1} parent=1 // pred_check
      _
    $region7: #{tpu_custom_call.1} parent=1 // pred_check_branch
      %23 = sbr.rel (0) target = $region9
    $region8: #{tpu_custom_call.1} parent=1 // pred_region
      _
    $region9: #{tpu_custom_call.1} parent=1 // pred_fallthru
      _
    // Predicated region
    $region10: #{tpu_custom_call.1} parent=1 // pred_check
      _
    $region11: #{tpu_custom_call.1} parent=1 // pred_check_branch
      %25 = sbr.rel (0) target = $region13
    $region12: #{tpu_custom_call.1} parent=1 // pred_region
      _
    $region13: #{tpu_custom_call.1} parent=1 // pred_fallthru
      _
    // Predicated region
    $region14: #{tpu_custom_call.1} parent=1 // pred_check
      _
    $region15: #{tpu_custom_call.1} parent=1 // pred_check_branch
      %27 = sbr.rel (0) target = $region17
    $region16: #{tpu_custom_call.1} parent=1 // pred_region
      %28 = dma.done [#allocation4], 128
    $region17: #{tpu_custom_call.1} parent=1 // pred_fallthru
      _
    %p29 = scmp.eq.s32.totalorder 0, 0
    // Predicated region
    $region18: #{tpu_custom_call.1} parent=1 // pred_check
      %p30 = pneg %p29
    $region19: #{tpu_custom_call.1} parent=1 // pred_check_branch
      %32 = sbr.rel (%p30) target = $region21
    $region20: #{tpu_custom_call.1} parent=1 // pred_region
      %v33 = vld [vmem:[%s2] sm:$0x1]
      %34 = vst [vmem:[#allocation2] sm:$0x1] %v33
    $region21: #{tpu_custom_call.1} parent=1 // pred_fallthru
      _
    %v35 = vld [vmem:[%s1] sm:$0x1]
    %v36 = vld [vmem:[#allocation2] sm:$0x1]
    %v37 = vld [vmem:[#allocation3] sm:$0x1]
    %v38 = vmul.f32 %v35, %v36
    %v39 = vadd.f32 %v37, %v38
    %v40 = vmax.f32 %v39, 0.0
    %41 = vst [vmem:[#allocation6] sm:$0x1] %v40
    %s42 = sadd.s32 0, 1
    %s43 = scalar_lea.vmem [#allocation3], %s42
    %v44 = vld [vmem:[%s43] sm:$0x1]
    %v45 = vmul.f32 %v35, %v40
    %v46 = vadd.f32 %v44, %v45
    %v47 = vmax.f32 %v46, 0.0
    %s48 = scalar_lea.vmem [#allocation6], %s42
    %49 = vst [vmem:[%s48] sm:$0x1] %v47
    %s50 = sadd.s32 0, 2
    %s51 = scalar_lea.vmem [#allocation3], %s50
    %v52 = vld [vmem:[%s51] sm:$0x1]
    %v53 = vmul.f32 %v35, %v47
    %v54 = vadd.f32 %v52, %v53
    %v55 = vmax.f32 %v54, 0.0
    %s56 = scalar_lea.vmem [#allocation6], %s50
    %57 = vst [vmem:[%s56] sm:$0x1] %v55
    %s58 = sadd.s32 0, 3
    %s59 = scalar_lea.vmem [#allocation3], %s58
    %v60 = vld [vmem:[%s59] sm:$0x1]
    %v61 = vmul.f32 %v35, %v55
    %v62 = vadd.f32 %v60, %v61
    %v63 = vmax.f32 %v62, 0.0
    %s64 = scalar_lea.vmem [#allocation6], %s58
    %65 = vst [vmem:[%s64] sm:$0x1] %v63
    %s66 = sadd.s32 0, 4
    %s67 = scalar_lea.vmem [#allocation3], %s66
    %v68 = vld [vmem:[%s67] sm:$0x1]
    %v69 = vmul.f32 %v35, %v63
    %v70 = vadd.f32 %v68, %v69
    %v71 = vmax.f32 %v70, 0.0
    %s72 = scalar_lea.vmem [#allocation6], %s66
    %73 = vst [vmem:[%s72] sm:$0x1] %v71
    %s74 = sadd.s32 0, 5
    %s75 = scalar_lea.vmem [#allocation3], %s74
    %v76 = vld [vmem:[%s75] sm:$0x1]
    %v77 = vmul.f32 %v35, %v71
    %v78 = vadd.f32 %v76, %v77
    %v79 = vmax.f32 %v78, 0.0
    %s80 = scalar_lea.vmem [#allocation6], %s74
    %81 = vst [vmem:[%s80] sm:$0x1] %v79
    %s82 = sadd.s32 0, 6
    %s83 = scalar_lea.vmem [#allocation3], %s82
    %v84 = vld [vmem:[%s83] sm:$0x1]
    %v85 = vmul.f32 %v35, %v79
    %v86 = vadd.f32 %v84, %v85
    %v87 = vmax.f32 %v86, 0.0
    %s88 = scalar_lea.vmem [#allocation6], %s82
    %89 = vst [vmem:[%s88] sm:$0x1] %v87
    %s90 = sadd.s32 0, 7
    %s91 = scalar_lea.vmem [#allocation3], %s90
    %v92 = vld [vmem:[%s91] sm:$0x1]
    %v93 = vmul.f32 %v35, %v87
    %v94 = vadd.f32 %v92, %v93
    %v95 = vmax.f32 %v94, 0.0
    %s96 = scalar_lea.vmem [#allocation6], %s90
    %97 = vst [vmem:[%s96] sm:$0x1] %v95
    %98 = vst [vmem:[#allocation2] sm:$0x1] %v95
    // Predicated region
    $region22: #{tpu_custom_call.1} parent=1 // pred_check
      _
    $region23: #{tpu_custom_call.1} parent=1 // pred_check_branch
      %100 = sbr.rel (0) target = $region25
    $region24: #{tpu_custom_call.1} parent=1 // pred_region
      %s102 = ssub.s32 128, 128
      %103 = vsyncadd [#allocation5], %s102
      %s104 = sshll.u32 [#allocation6], 4
      %s105 = int_to_ptr.vmem [resolvable:$true] %s104
      %110 = dma.vmem_to_hbm [thread:$0]  %s105, 128, %s3, [#allocation5], 16, 16, 1
    $region25: #{tpu_custom_call.1} parent=1 // pred_fallthru
      _
    // Predicated region
    $region26: #{tpu_custom_call.1} parent=1 // pred_check
      _
    $region27: #{tpu_custom_call.1} parent=1 // pred_check_branch
      %112 = sbr.rel (0) target = $region29
    $region28: #{tpu_custom_call.1} parent=1 // pred_region
      %113 = dma.done [#allocation5], 128
    $region29: #{tpu_custom_call.1} parent=1 // pred_fallthru
      _
    %114 = vsyncpa [#allocation4], 1
    %115 = vsyncpa [#allocation5], 1

</llo_original>
